<compile_context>
chip_gen: v7x
topology: tpu7x:2x2x1
jax: 0.10.0
libtpu: 0.0.40
codegen_flags: <defaults>
</compile_context>

<pallas_src>
import functools
import math

import jax
import jax.numpy as jnp
from jax.experimental import pallas as pl
from jax.experimental.pallas import tpu as pltpu


def _round_up(x, m):
    return (x + m - 1) // m * m


def _ffn_kernel(x_ref, w13_ref, w2_ref, o_ref, acc_ref, *, th):
    h = pl.program_id(1)

    @pl.when(h == 0)
    def _():
        acc_ref[...] = jnp.zeros_like(acc_ref)

    x = x_ref[...]
    # Fused gate/up projection: one MXU dot producing (tm, 2*th).
    h13 = jnp.dot(x, w13_ref[...], preferred_element_type=jnp.float32)
    h1 = h13[:, :th]
    h3 = h13[:, th:]
    # SwiGLU gate in f32: sigmoid goes to the EUP, multiplies are VPU filler
    # under the MXU for large tiles.
    g = (h1 * jax.nn.sigmoid(h1)) * h3
    # Partial down-projection, accumulated in f32 over hidden tiles.
    acc_ref[...] += jnp.dot(g.astype(x.dtype), w2_ref[...],
                            preferred_element_type=jnp.float32)

    @pl.when(h == pl.num_programs(1) - 1)
    def _():
        # dropout p=0.0 is the identity; nothing to apply.
        o_ref[...] = acc_ref[...].astype(o_ref.dtype)


def _pick_th(H, cap):
    """Largest multiple of 128 that divides H and is <= cap."""
    for cand in (512, 384, 256, 128):
        if cand <= cap and H % cand == 0:
            return cand
    return 128


def _tile_vmem_bytes(tm, th, D, itemsize):
    x_b = 2 * tm * D * itemsize            # x tile, double-buffered
    w13_b = 2 * D * (2 * th) * itemsize    # fused [w1|w3] tile, double-buffered
    w2_b = 2 * th * D * itemsize           # w2 tile, double-buffered
    o_b = 2 * tm * D * itemsize            # output tile, double-buffered
    acc_b = tm * D * 4                     # f32 accumulator scratch
    return x_b + w13_b + w2_b + o_b + acc_b


def feed_forward(x, w1t, w3t, w2t, *, tm=None, th=None,
                 compute_dtype=jnp.bfloat16,
                 vmem_budget_bytes=48 << 20):
    """x: (B, S, D) or (M, D); w1t/w3t: (D, H); w2t: (H, D)."""
    orig_shape = x.shape
    orig_dtype = x.dtype
    D = x.shape[-1]
    x2 = x.reshape(-1, D)
    M = x2.shape[0]
    H = w1t.shape[1]
    assert D % 128 == 0 and H % 128 == 0, "dim and hidden must be lane-aligned"

    itemsize = jnp.dtype(compute_dtype).itemsize

    # --- tile selection --------------------------------------------------
    if th is None:
        th = _pick_th(H, cap=512)
    assert H % th == 0 and th % 128 == 0

    if tm is None:
        # Sublane-aligned (16 for bf16), capped so the VMEM budget holds on
        # all generations (v7x has only 64 MiB per TC).
        tm = min(512, _round_up(M, 16))
        while _tile_vmem_bytes(tm, th, D, itemsize) > vmem_budget_bytes and th > 128:
            th //= 2
        while _tile_vmem_bytes(tm, th, D, itemsize) > vmem_budget_bytes and tm > 128:
            tm //= 2
    assert tm % 8 == 0

    Mp = _round_up(M, tm)
    if Mp != M:
        x2 = jnp.pad(x2, ((0, Mp - M), (0, 0)))

    # --- dtype + fused weight layout -------------------------------------
    x2c = x2.astype(compute_dtype)
    Ht = H // th
    # Interleave per hidden tile so BlockSpec block h == [w1_blk_h | w3_blk_h].
    w13 = jnp.concatenate(
        [w1t.reshape(D, Ht, th), w3t.reshape(D, Ht, th)], axis=2
    ).reshape(D, 2 * H).astype(compute_dtype)
    w2c = w2t.astype(compute_dtype)

    grid = (Mp // tm, Ht)
    est = _tile_vmem_bytes(tm, th, D, itemsize)
    vmem_limit = int(min(max(est + (8 << 20), 32 << 20), 60 << 20))

    out = pl.pallas_call(
        functools.partial(_ffn_kernel, th=th),
        out_shape=jax.ShapeDtypeStruct((Mp, D), orig_dtype),
        grid_spec=pltpu.PrefetchScalarGridSpec(
            num_scalar_prefetch=0,
            grid=grid,
            in_specs=[
                pl.BlockSpec((tm, D), lambda i, h: (i, 0)),        # x tile
                pl.BlockSpec((D, 2 * th), lambda i, h: (0, h)),    # [w1|w3] tile
                pl.BlockSpec((th, D), lambda i, h: (h, 0)),        # w2 tile
            ],
            out_specs=pl.BlockSpec((tm, D), lambda i, h: (i, 0)),
            scratch_shapes=[pltpu.VMEM((tm, D), jnp.float32)],
        ),
        compiler_params=pltpu.CompilerParams(
            dimension_semantics=("parallel", "arbitrary"),
            vmem_limit_bytes=vmem_limit),
    )(x2c, w13, w2c)

    return out[:M].reshape(orig_shape)


def _ffn_reference(x, w1t, w3t, w2t, compute_dtype=jnp.bfloat16):
    """Mirrors the kernel's bf16-matmul / f32-accumulate path."""
    xc = x.astype(compute_dtype)
    w1c = w1t.astype(compute_dtype)
    w3c = w3t.astype(compute_dtype)
    w2c = w2t.astype(compute_dtype)
    h1 = jnp.dot(xc, w1c, preferred_element_type=jnp.float32)
    h3 = jnp.dot(xc, w3c, preferred_element_type=jnp.float32)
    g = (h1 * jax.nn.sigmoid(h1)) * h3
    out = jnp.dot(g.astype(compute_dtype), w2c,
                  preferred_element_type=jnp.float32)
    return out.astype(x.dtype)


if __name__ == "__main__":
    # Small ModelArgs-consistent shapes:
    #   dim = 128, hidden_dim = None -> 4*dim = 512 -> 2/3 -> 341
    #   multiple_of = 256 -> round up -> hidden = 512
    dim = 128
    multiple_of = 256
    hidden = 4 * dim
    hidden = int(2 * hidden / 3)
    hidden = multiple_of * ((hidden + multiple_of - 1) // multiple_of)  # 512

    batch, seq = 2, 8

    key = jax.random.PRNGKey(0)
    kx, k1, k2, k3 = jax.random.split(key, 4)

    x = jax.random.normal(kx, (batch, seq, dim), dtype=jnp.float32)

    # Deterministic init matching nn.Linear's kaiming-uniform-ish scale.
    def init_linear(k, fan_in, fan_out):
        bound = 1.0 / math.sqrt(fan_in)
        # PyTorch weight is (out, in); we store the transpose (in, out).
        return jax.random.uniform(k, (fan_in, fan_out), jnp.float32,
                                  minval=-bound, maxval=bound)

    w1t = init_linear(k1, dim, hidden)     # w1.weight.T
    w3t = init_linear(k3, dim, hidden)     # w3.weight.T
    w2t = init_linear(k2, hidden, dim)     # w2.weight.T

    out = feed_forward(x, w1t, w3t, w2t)
    out = jax.block_until_ready(out)

    ref = _ffn_reference(x, w1t, w3t, w2t)
    assert out.shape == x.shape
    err = float(jnp.max(jnp.abs(out - ref)))
    assert jnp.allclose(out, ref, atol=1e-2, rtol=1e-2), err

    # TODO(synk): nn.Dropout(p=0.0) is an identity; no stochastic dropout path.
    print("KERNEL_OK")
</pallas_src>

<mosaic_0001>
module attributes {stable_mosaic.version = 11 : i64} {
  func.func @_ffn_kernel(%arg0: i32, %arg1: i32, %arg2: memref<16x128xbf16, #tpu.memory_space<vmem>>, %arg3: memref<128x1024xbf16, #tpu.memory_space<vmem>>, %arg4: memref<512x128xbf16, #tpu.memory_space<vmem>>, %arg5: memref<16x128xf32, #tpu.memory_space<vmem>>, %arg6: memref<16x128xf32, #tpu.memory_space<vmem>>) attributes {dimension_semantics = [#tpu.dimension_semantics<parallel>, #tpu.dimension_semantics<arbitrary>], iteration_bounds = array<i64: 1, 1>, scalar_prefetch = 0 : i64, scratch_operands = 1 : i64, tpu.core_type = #tpu.core_type<tc>, window_params = [{transform_indices = @transform_0, window_bounds = array<i64: 16, 128>}, {transform_indices = @transform_1, window_bounds = array<i64: 128, 1024>}, {transform_indices = @transform_2, window_bounds = array<i64: 512, 128>}, {transform_indices = @transform_3, window_bounds = array<i64: 16, 128>}]} {
    %c0_i32 = arith.constant 0 : i32
    %0 = arith.cmpi eq, %arg1, %c0_i32 : i32
    %1 = arith.extui %0 : i1 to i32
    %c0_i32_0 = arith.constant 0 : i32
    %2 = arith.cmpi ne, %1, %c0_i32_0 : i32
    scf.if %2 {
      %cst_14 = arith.constant 0.000000e+00 : f32
      %24 = vector.broadcast %cst_14 : f32 to vector<16x128xf32>
      %c0_15 = arith.constant 0 : index
      %c0_16 = arith.constant 0 : index
      %25 = vector.load %arg6[%c0_15, %c0_16] : memref<16x128xf32, #tpu.memory_space<vmem>>, vector<16x128xf32>
      tpu.vector_store %arg6[%c0_15, %c0_16], %24 {strides = array<i32>} : memref<16x128xf32, #tpu.memory_space<vmem>>, vector<16x128xf32>,
    } else {
    }
    %c0 = arith.constant 0 : index
    %c0_1 = arith.constant 0 : index
    %3 = vector.load %arg2[%c0, %c0_1] : memref<16x128xbf16, #tpu.memory_space<vmem>>, vector<16x128xbf16>
    %c0_2 = arith.constant 0 : index
    %c0_3 = arith.constant 0 : index
    %4 = vector.load %arg3[%c0_2, %c0_3] : memref<128x1024xbf16, #tpu.memory_space<vmem>>, vector<128x1024xbf16>
    %cst = arith.constant dense<0.000000e+00> : vector<16x1024xf32>
    %5 = tpu.matmul %3, %4, %cst {dimension_numbers = #tpu.dot_dimension_numbers<[1], [0], [0], [1], [0, 0, 1, 1], [], []>} : vector<16x128xbf16>, vector<128x1024xbf16>, vector<16x1024xf32> -> vector<16x1024xf32>
    %6 = vector.extract_strided_slice %5 {offsets = [0, 0], sizes = [16, 512], strides = [1, 1]} : vector<16x1024xf32> to vector<16x512xf32>
    %7 = vector.extract_strided_slice %5 {offsets = [0, 512], sizes = [16, 512], strides = [1, 1]} : vector<16x1024xf32> to vector<16x512xf32>
    %8 = arith.negf %6 : vector<16x512xf32>
    %9 = math.exp %8 : vector<16x512xf32>
    %cst_4 = arith.constant 1.000000e+00 : f32
    %10 = vector.broadcast %cst_4 : f32 to vector<16x512xf32>
    %11 = arith.addf %10, %9 : vector<16x512xf32>
    %12 = arith.divf %10, %11 : vector<16x512xf32>
    %13 = arith.mulf %6, %12 : vector<16x512xf32>
    %14 = arith.mulf %13, %7 : vector<16x512xf32>
    %c0_5 = arith.constant 0 : index
    %c0_6 = arith.constant 0 : index
    %15 = vector.load %arg6[%c0_5, %c0_6] : memref<16x128xf32, #tpu.memory_space<vmem>>, vector<16x128xf32>
    %16 = arith.truncf %14 : vector<16x512xf32> to vector<16x512xbf16>
    %c0_7 = arith.constant 0 : index
    %c0_8 = arith.constant 0 : index
    %17 = vector.load %arg4[%c0_7, %c0_8] : memref<512x128xbf16, #tpu.memory_space<vmem>>, vector<512x128xbf16>
    %cst_9 = arith.constant dense<0.000000e+00> : vector<16x128xf32>
    %18 = tpu.matmul %16, %17, %cst_9 {dimension_numbers = #tpu.dot_dimension_numbers<[1], [0], [0], [1], [0, 0, 1, 1], [], []>} : vector<16x512xbf16>, vector<512x128xbf16>, vector<16x128xf32> -> vector<16x128xf32>
    %19 = arith.addf %15, %18 : vector<16x128xf32>
    %c0_10 = arith.constant 0 : index
    %c0_11 = arith.constant 0 : index
    %20 = vector.load %arg6[%c0_10, %c0_11] : memref<16x128xf32, #tpu.memory_space<vmem>>, vector<16x128xf32>
    tpu.vector_store %arg6[%c0_10, %c0_11], %19 {strides = array<i32>} : memref<16x128xf32, #tpu.memory_space<vmem>>, vector<16x128xf32>,
    %c0_i32_12 = arith.constant 0 : i32
    %21 = arith.cmpi eq, %arg1, %c0_i32_12 : i32
    %22 = arith.extui %21 : i1 to i32
    %c0_i32_13 = arith.constant 0 : i32
    %23 = arith.cmpi ne, %22, %c0_i32_13 : i32
    scf.if %23 {
      %c0_14 = arith.constant 0 : index
      %c0_15 = arith.constant 0 : index
      %24 = vector.load %arg6[%c0_14, %c0_15] : memref<16x128xf32, #tpu.memory_space<vmem>>, vector<16x128xf32>
      %c0_16 = arith.constant 0 : index
      %c0_17 = arith.constant 0 : index
      %25 = vector.load %arg5[%c0_16, %c0_17] : memref<16x128xf32, #tpu.memory_space<vmem>>, vector<16x128xf32>
      tpu.vector_store %arg5[%c0_16, %c0_17], %24 {strides = array<i32>} : memref<16x128xf32, #tpu.memory_space<vmem>>, vector<16x128xf32>,
    } else {
    }
    return
  }
  func.func @transform_0(%arg0: i32, %arg1: i32) -> (i32, i32) {
    %c0_i32 = arith.constant 0 : i32
    %c0_i32_0 = arith.constant 0 : i32
    return %arg0, %c0_i32 : i32, i32
  }
  func.func @transform_1(%arg0: i32, %arg1: i32) -> (i32, i32) {
    %c0_i32 = arith.constant 0 : i32
    %c0_i32_0 = arith.constant 0 : i32
    return %c0_i32, %arg1 : i32, i32
  }
  func.func @transform_2(%arg0: i32, %arg1: i32) -> (i32, i32) {
    %c0_i32 = arith.constant 0 : i32
    %c0_i32_0 = arith.constant 0 : i32
    return %arg1, %c0_i32 : i32, i32
  }
  func.func @transform_3(%arg0: i32, %arg1: i32) -> (i32, i32) {
    %c0_i32 = arith.constant 0 : i32
    %c0_i32_0 = arith.constant 0 : i32
    return %arg0, %c0_i32 : i32, i32
  }
}

</mosaic_0001>

<llo_original>
// kernel: tpu_custom_call.1
$region0: #{tpu_custom_call.1}
  #allocation0 [shape = 'u32[]', space=smem, size = 0x4, offset = 0x4, fixed_abs, tag = 'smem constant byte address 0x4 - core index']
  #allocation1 [shape = 'u32[144,128]{1,0:T(1,128)}', space=vmem, size = 0x12000, scoped, tag = 'internal scratch']
  #allocation2 [shape = 'f32[16,128]{1,0:T(8,128)}', space=vmem, size = 0x2000, scoped, tag = 'scratch operand']
  %s0 = inlined_call_operand.hbm [shape: bf16[16,128], index: 0, kind: input, shape index: {}]
  %s1 = inlined_call_operand.hbm [shape: bf16[128,1024], index: 1, kind: input, shape index: {}]
  %s2 = inlined_call_operand.hbm [shape: bf16[512,128], index: 2, kind: input, shape index: {}]
  %s3 = inlined_call_operand.hbm [shape: f32[16,128], index: 3, kind: output, shape index: {}]
  %s4 = sld [smem:[#allocation0]]
  $region42: #{tpu_custom_call.1} parent=0
    _
  %s6 = ssub.s32 1, %s4
  %s7 = scalar_select 0, %s6, %s4
  $region1: #{tpu_custom_call.1} parent=0
    #allocation3 [shape = 'u8[4096]{0}', space=vmem, size = 0x1000, scoped, tag = 'input window, operand 0, single buffered']
    #allocation4 [shape = 's32[1]{0}', space=sflag, size = 0x4, scoped, tag = 'scoped memory for tpu_custom_call.1']
    #allocation5 [shape = 's32[1]{0}', space=sflag, size = 0x4, scoped, tag = 'scoped memory for tpu_custom_call.1']
    #allocation6 [shape = 'u8[262144]{0}', space=vmem, size = 0x40000, scoped, tag = 'input window, operand 1, single buffered']
    #allocation7 [shape = 's32[1]{0}', space=sflag, size = 0x4, scoped, tag = 'scoped memory for tpu_custom_call.1']
    #allocation8 [shape = 'u8[131072]{0}', space=vmem, size = 0x20000, scoped, tag = 'input window, operand 2, single buffered']
    #allocation9 [shape = 'u8[8192]{0}', space=vmem, size = 0x2000, scoped, tag = 'output window, operand 0, single buffered']
    %8 = vsyncpa [#allocation4], 0
    %9 = vsyncpa [#allocation7], 0
    %10 = vsyncpa [#allocation5], 0
    // Predicated region
    $region2: #{tpu_custom_call.1} parent=1 // pred_check
      _
    $region3: #{tpu_custom_call.1} parent=1 // pred_check_branch
      %12 = sbr.rel (0) target = $region5
    $region4: #{tpu_custom_call.1} parent=1 // pred_region
      %s14 = ssub.s32 128, 128
      %15 = vsyncadd [#allocation4], %s14
      %s16 = sshll.u32 [#allocation3], 4
      %s17 = int_to_ptr.vmem [resolvable:$true] %s16
      %22 = dma.hbm_to_vmem [thread:$0]  %s0, 128, %s17, [#allocation4], 64, 64, 4
    $region5: #{tpu_custom_call.1} parent=1 // pred_fallthru
      _
    // Predicated region
    $region6: #{tpu_custom_call.1} parent=1 // pred_check
      _
    $region7: #{tpu_custom_call.1} parent=1 // pred_check_branch
      %24 = sbr.rel (0) target = $region9
    $region8: #{tpu_custom_call.1} parent=1 // pred_region
      %s26 = ssub.s32 8192, 8192
      %27 = vsyncadd [#allocation7], %s26
      %s28 = sshll.u32 [#allocation6], 4
      %s29 = int_to_ptr.vmem [resolvable:$true] %s28
      %34 = dma.hbm_to_vmem [thread:$0]  %s1, 8192, %s29, [#allocation7], 512, 512, 32
    $region9: #{tpu_custom_call.1} parent=1 // pred_fallthru
      _
    // Predicated region
    $region10: #{tpu_custom_call.1} parent=1 // pred_check
      _
    $region11: #{tpu_custom_call.1} parent=1 // pred_check_branch
      %36 = sbr.rel (0) target = $region13
    $region12: #{tpu_custom_call.1} parent=1 // pred_region
      %s38 = ssub.s32 4096, 4096
      %39 = vsyncadd [#allocation7], %s38
      %s40 = sshll.u32 [#allocation8], 4
      %s41 = int_to_ptr.vmem [resolvable:$true] %s40
      %46 = dma.hbm_to_vmem [thread:$0]  %s2, 4096, %s41, [#allocation7], 64, 64, 4
    $region13: #{tpu_custom_call.1} parent=1 // pred_fallthru
      _
    // Predicated region
    $region14: #{tpu_custom_call.1} parent=1 // pred_check
      _
    $region15: #{tpu_custom_call.1} parent=1 // pred_check_branch
      %48 = sbr.rel (0) target = $region17
    $region16: #{tpu_custom_call.1} parent=1 // pred_region
      %49 = dma.done [#allocation4], 128
    $region17: #{tpu_custom_call.1} parent=1 // pred_fallthru
      _
    // Predicated region
    $region18: #{tpu_custom_call.1} parent=1 // pred_check
      _
    $region19: #{tpu_custom_call.1} parent=1 // pred_check_branch
      %51 = sbr.rel (0) target = $region21
    $region20: #{tpu_custom_call.1} parent=1 // pred_region
      %52 = dma.done [#allocation7], 8192
    $region21: #{tpu_custom_call.1} parent=1 // pred_fallthru
      _
    // Predicated region
    $region22: #{tpu_custom_call.1} parent=1 // pred_check
      _
    $region23: #{tpu_custom_call.1} parent=1 // pred_check_branch
      %54 = sbr.rel (0) target = $region25
    $region24: #{tpu_custom_call.1} parent=1 // pred_region
      %55 = dma.done [#allocation7], 4096
    $region25: #{tpu_custom_call.1} parent=1 // pred_fallthru
      _
    %p57 = scmp.eq.s32.totalorder 0, 0
    // Predicated region
    $region26: #{tpu_custom_call.1} parent=1 // pred_check
      %p58 = pneg %p57
    $region27: #{tpu_custom_call.1} parent=1 // pred_check_branch
      %60 = sbr.rel (%p58) target = $region29
    $region28: #{tpu_custom_call.1} parent=1 // pred_region
      %61 = vst [vmem:[#allocation2] sm:$0xff] 0.0
      %62 = vst [vmem:[#allocation2 + $0x8] sm:$0xff] 0.0
    $region29: #{tpu_custom_call.1} parent=1 // pred_fallthru
      _
    %v63 = vld [vmem:[#allocation3] sm:$0xf]
    %v64 = vld [vmem:[#allocation3 + $0x4] sm:$0xf]
    %v65 = vld [vmem:[#allocation6] sm:$0xff]
    %v66 = vld [vmem:[#allocation6 + $0x8] sm:$0xff]
    %v67 = vld [vmem:[#allocation6 + $0x10] sm:$0xff]
    %v68 = vld [vmem:[#allocation6 + $0x18] sm:$0xff]
    %v69 = vld [vmem:[#allocation6 + $0x20] sm:$0xff]
    %v70 = vld [vmem:[#allocation6 + $0x28] sm:$0xff]
    %v71 = vld [vmem:[#allocation6 + $0x30] sm:$0xff]
    %v72 = vld [vmem:[#allocation6 + $0x38] sm:$0xff]
    %v73 = vld [vmem:[#allocation6 + $0x40] sm:$0xff]
    %v74 = vld [vmem:[#allocation6 + $0x48] sm:$0xff]
    %v75 = vld [vmem:[#allocation6 + $0x50] sm:$0xff]
    %v76 = vld [vmem:[#allocation6 + $0x58] sm:$0xff]
    %v77 = vld [vmem:[#allocation6 + $0x60] sm:$0xff]
    %v78 = vld [vmem:[#allocation6 + $0x68] sm:$0xff]
    %v79 = vld [vmem:[#allocation6 + $0x70] sm:$0xff]
    %v80 = vld [vmem:[#allocation6 + $0x78] sm:$0xff]
    %v81 = vld [vmem:[#allocation6 + $0x80] sm:$0xff]
    %v82 = vld [vmem:[#allocation6 + $0x88] sm:$0xff]
    %v83 = vld [vmem:[#allocation6 + $0x90] sm:$0xff]
    %v84 = vld [vmem:[#allocation6 + $0x98] sm:$0xff]
    %v85 = vld [vmem:[#allocation6 + $0xa0] sm:$0xff]
    %v86 = vld [vmem:[#allocation6 + $0xa8] sm:$0xff]
    %v87 = vld [vmem:[#allocation6 + $0xb0] sm:$0xff]
    %v88 = vld [vmem:[#allocation6 + $0xb8] sm:$0xff]
    %v89 = vld [vmem:[#allocation6 + $0xc0] sm:$0xff]
    %v90 = vld [vmem:[#allocation6 + $0xc8] sm:$0xff]
    %v91 = vld [vmem:[#allocation6 + $0xd0] sm:$0xff]
    %v92 = vld [vmem:[#allocation6 + $0xd8] sm:$0xff]
    %v93 = vld [vmem:[#allocation6 + $0xe0] sm:$0xff]
    %v94 = vld [vmem:[#allocation6 + $0xe8] sm:$0xff]
    %v95 = vld [vmem:[#allocation6 + $0xf0] sm:$0xff]
    %v96 = vld [vmem:[#allocation6 + $0xf8] sm:$0xff]
    %v97 = vld [vmem:[#allocation6 + $0x100] sm:$0xff]
    %v98 = vld [vmem:[#allocation6 + $0x108] sm:$0xff]
    %v99 = vld [vmem:[#allocation6 + $0x110] sm:$0xff]
    %v100 = vld [vmem:[#allocation6 + $0x118] sm:$0xff]
    %v101 = vld [vmem:[#allocation6 + $0x120] sm:$0xff]
    %v102 = vld [vmem:[#allocation6 + $0x128] sm:$0xff]
    %v103 = vld [vmem:[#allocation6 + $0x130] sm:$0xff]
    %v104 = vld [vmem:[#allocation6 + $0x138] sm:$0xff]
    %v105 = vld [vmem:[#allocation6 + $0x140] sm:$0xff]
    %v106 = vld [vmem:[#allocation6 + $0x148] sm:$0xff]
    %v107 = vld [vmem:[#allocation6 + $0x150] sm:$0xff]
    %v108 = vld [vmem:[#allocation6 + $0x158] sm:$0xff]
    %v109 = vld [vmem:[#allocation6 + $0x160] sm:$0xff]
    %v110 = vld [vmem:[#allocation6 + $0x168] sm:$0xff]
    %v111 = vld [vmem:[#allocation6 + $0x170] sm:$0xff]
    %v112 = vld [vmem:[#allocation6 + $0x178] sm:$0xff]
    %v113 = vld [vmem:[#allocation6 + $0x180] sm:$0xff]
    %v114 = vld [vmem:[#allocation6 + $0x188] sm:$0xff]
    %v115 = vld [vmem:[#allocation6 + $0x190] sm:$0xff]
    %v116 = vld [vmem:[#allocation6 + $0x198] sm:$0xff]
    %v117 = vld [vmem:[#allocation6 + $0x1a0] sm:$0xff]
    %v118 = vld [vmem:[#allocation6 + $0x1a8] sm:$0xff]
    %v119 = vld [vmem:[#allocation6 + $0x1b0] sm:$0xff]
    %v120 = vld [vmem:[#allocation6 + $0x1b8] sm:$0xff]
    %v121 = vld [vmem:[#allocation6 + $0x1c0] sm:$0xff]
    %v122 = vld [vmem:[#allocation6 + $0x1c8] sm:$0xff]
    %v123 = vld [vmem:[#allocation6 + $0x1d0] sm:$0xff]
    %v124 = vld [vmem:[#allocation6 + $0x1d8] sm:$0xff]
    %v125 = vld [vmem:[#allocation6 + $0x1e0] sm:$0xff]
    %v126 = vld [vmem:[#allocation6 + $0x1e8] sm:$0xff]
    %v127 = vld [vmem:[#allocation6 + $0x1f0] sm:$0xff]
    %v128 = vld [vmem:[#allocation6 + $0x1f8] sm:$0xff]
    %v131 = vunpack.c.l.b16 %v63
    %v132 = vunpack.c.l.b16 %v64
    %v133 = vpack.c.b16 %v132, %v131
    %v199 = vunpack.c.l.b16 %v65
    %v200 = vunpack.c.h.b16 %v65
    %v201 = vunpack.c.l.b16 %v66
    %v202 = vunpack.c.h.b16 %v66
    %v203 = vunpack.c.l.b16 %v67
    %v204 = vunpack.c.h.b16 %v67
    %v205 = vunpack.c.l.b16 %v68
    %v206 = vunpack.c.h.b16 %v68
    %v207 = vunpack.c.l.b16 %v69
    %v208 = vunpack.c.h.b16 %v69
    %v209 = vunpack.c.l.b16 %v70
    %v210 = vunpack.c.h.b16 %v70
    %v211 = vunpack.c.l.b16 %v71
    %v212 = vunpack.c.h.b16 %v71
    %v213 = vunpack.c.l.b16 %v72
    %v214 = vunpack.c.h.b16 %v72
    %v215 = vunpack.c.l.b16 %v73
    %v216 = vunpack.c.h.b16 %v73
    %v217 = vunpack.c.l.b16 %v74
    %v218 = vunpack.c.h.b16 %v74
    %v219 = vunpack.c.l.b16 %v75
    %v220 = vunpack.c.h.b16 %v75
    %v221 = vunpack.c.l.b16 %v76
    %v222 = vunpack.c.h.b16 %v76
    %v223 = vunpack.c.l.b16 %v77
    %v224 = vunpack.c.h.b16 %v77
    %v225 = vunpack.c.l.b16 %v78
    %v226 = vunpack.c.h.b16 %v78
    %v227 = vunpack.c.l.b16 %v79
    %v228 = vunpack.c.h.b16 %v79
    %v229 = vunpack.c.l.b16 %v80
    %v230 = vunpack.c.h.b16 %v80
    %v231 = vunpack.c.l.b16 %v81
    %v232 = vunpack.c.h.b16 %v81
    %v233 = vunpack.c.l.b16 %v82
    %v234 = vunpack.c.h.b16 %v82
    %v235 = vunpack.c.l.b16 %v83
    %v236 = vunpack.c.h.b16 %v83
    %v237 = vunpack.c.l.b16 %v84
    %v238 = vunpack.c.h.b16 %v84
    %v239 = vunpack.c.l.b16 %v85
    %v240 = vunpack.c.h.b16 %v85
    %v241 = vunpack.c.l.b16 %v86
    %v242 = vunpack.c.h.b16 %v86
    %v243 = vunpack.c.l.b16 %v87
    %v244 = vunpack.c.h.b16 %v87
    %v245 = vunpack.c.l.b16 %v88
    %v246 = vunpack.c.h.b16 %v88
    %v247 = vunpack.c.l.b16 %v89
    %v248 = vunpack.c.h.b16 %v89
    %v249 = vunpack.c.l.b16 %v90
    %v250 = vunpack.c.h.b16 %v90
    %v251 = vunpack.c.l.b16 %v91
    %v252 = vunpack.c.h.b16 %v91
    %v253 = vunpack.c.l.b16 %v92
    %v254 = vunpack.c.h.b16 %v92
    %v255 = vunpack.c.l.b16 %v93
    %v256 = vunpack.c.h.b16 %v93
    %v257 = vunpack.c.l.b16 %v94
    %v258 = vunpack.c.h.b16 %v94
    %v259 = vunpack.c.l.b16 %v95
    %v260 = vunpack.c.h.b16 %v95
    %v261 = vunpack.c.l.b16 %v96
    %v262 = vunpack.c.h.b16 %v96
    %v263 = vunpack.c.l.b16 %v97
    %v264 = vunpack.c.h.b16 %v97
    %v265 = vunpack.c.l.b16 %v98
    %v266 = vunpack.c.h.b16 %v98
    %v267 = vunpack.c.l.b16 %v99
    %v268 = vunpack.c.h.b16 %v99
    %v269 = vunpack.c.l.b16 %v100
    %v270 = vunpack.c.h.b16 %v100
    %v271 = vunpack.c.l.b16 %v101
    %v272 = vunpack.c.h.b16 %v101
    %v273 = vunpack.c.l.b16 %v102
    %v274 = vunpack.c.h.b16 %v102
    %v275 = vunpack.c.l.b16 %v103
    %v276 = vunpack.c.h.b16 %v103
    %v277 = vunpack.c.l.b16 %v104
    %v278 = vunpack.c.h.b16 %v104
    %v279 = vunpack.c.l.b16 %v105
    %v280 = vunpack.c.h.b16 %v105
    %v281 = vunpack.c.l.b16 %v106
    %v282 = vunpack.c.h.b16 %v106
    %v283 = vunpack.c.l.b16 %v107
    %v284 = vunpack.c.h.b16 %v107
    %v285 = vunpack.c.l.b16 %v108
    %v286 = vunpack.c.h.b16 %v108
    %v287 = vunpack.c.l.b16 %v109
    %v288 = vunpack.c.h.b16 %v109
    %v289 = vunpack.c.l.b16 %v110
    %v290 = vunpack.c.h.b16 %v110
    %v291 = vunpack.c.l.b16 %v111
    %v292 = vunpack.c.h.b16 %v111
    %v293 = vunpack.c.l.b16 %v112
    %v294 = vunpack.c.h.b16 %v112
    %v295 = vunpack.c.l.b16 %v113
    %v296 = vunpack.c.h.b16 %v113
    %v297 = vunpack.c.l.b16 %v114
    %v298 = vunpack.c.h.b16 %v114
    %v299 = vunpack.c.l.b16 %v115
    %v300 = vunpack.c.h.b16 %v115
    %v301 = vunpack.c.l.b16 %v116
    %v302 = vunpack.c.h.b16 %v116
    %v303 = vunpack.c.l.b16 %v117
    %v304 = vunpack.c.h.b16 %v117
    %v305 = vunpack.c.l.b16 %v118
    %v306 = vunpack.c.h.b16 %v118
    %v307 = vunpack.c.l.b16 %v119
    %v308 = vunpack.c.h.b16 %v119
    %v309 = vunpack.c.l.b16 %v120
    %v310 = vunpack.c.h.b16 %v120
    %v311 = vunpack.c.l.b16 %v121
    %v312 = vunpack.c.h.b16 %v121
    %v313 = vunpack.c.l.b16 %v122
    %v314 = vunpack.c.h.b16 %v122
    %v315 = vunpack.c.l.b16 %v123
    %v316 = vunpack.c.h.b16 %v123
    %v317 = vunpack.c.l.b16 %v124
    %v318 = vunpack.c.h.b16 %v124
    %v319 = vunpack.c.l.b16 %v125
    %v320 = vunpack.c.h.b16 %v125
    %v321 = vunpack.c.l.b16 %v126
    %v322 = vunpack.c.h.b16 %v126
    %v323 = vunpack.c.l.b16 %v127
    %v324 = vunpack.c.h.b16 %v127
    %v325 = vunpack.c.l.b16 %v128
    %v326 = vunpack.c.h.b16 %v128
    %v327 = vpack.c.b16 %v207, %v199
    %v328 = vpack.c.b16 %v208, %v200
    %v329 = vpack.c.b16 %v209, %v201
    %v330 = vpack.c.b16 %v210, %v202
    %v331 = vpack.c.b16 %v211, %v203
    %v332 = vpack.c.b16 %v212, %v204
    %v333 = vpack.c.b16 %v213, %v205
    %v334 = vpack.c.b16 %v214, %v206
    %v335 = vpack.c.b16 %v223, %v215
    %v336 = vpack.c.b16 %v224, %v216
    %v337 = vpack.c.b16 %v225, %v217
    %v338 = vpack.c.b16 %v226, %v218
    %v339 = vpack.c.b16 %v227, %v219
    %v340 = vpack.c.b16 %v228, %v220
    %v341 = vpack.c.b16 %v229, %v221
    %v342 = vpack.c.b16 %v230, %v222
    %v343 = vpack.c.b16 %v239, %v231
    %v344 = vpack.c.b16 %v240, %v232
    %v345 = vpack.c.b16 %v241, %v233
    %v346 = vpack.c.b16 %v242, %v234
    %v347 = vpack.c.b16 %v243, %v235
    %v348 = vpack.c.b16 %v244, %v236
    %v349 = vpack.c.b16 %v245, %v237
    %v350 = vpack.c.b16 %v246, %v238
    %v351 = vpack.c.b16 %v255, %v247
    %v352 = vpack.c.b16 %v256, %v248
    %v353 = vpack.c.b16 %v257, %v249
    %v354 = vpack.c.b16 %v258, %v250
    %v355 = vpack.c.b16 %v259, %v251
    %v356 = vpack.c.b16 %v260, %v252
    %v357 = vpack.c.b16 %v261, %v253
    %v358 = vpack.c.b16 %v262, %v254
    %v359 = vpack.c.b16 %v271, %v263
    %v360 = vpack.c.b16 %v272, %v264
    %v361 = vpack.c.b16 %v273, %v265
    %v362 = vpack.c.b16 %v274, %v266
    %v363 = vpack.c.b16 %v275, %v267
    %v364 = vpack.c.b16 %v276, %v268
    %v365 = vpack.c.b16 %v277, %v269
    %v366 = vpack.c.b16 %v278, %v270
    %v367 = vpack.c.b16 %v287, %v279
    %v368 = vpack.c.b16 %v288, %v280
    %v369 = vpack.c.b16 %v289, %v281
    %v370 = vpack.c.b16 %v290, %v282
    %v371 = vpack.c.b16 %v291, %v283
    %v372 = vpack.c.b16 %v292, %v284
    %v373 = vpack.c.b16 %v293, %v285
    %v374 = vpack.c.b16 %v294, %v286
    %v375 = vpack.c.b16 %v303, %v295
    %v376 = vpack.c.b16 %v304, %v296
    %v377 = vpack.c.b16 %v305, %v297
    %v378 = vpack.c.b16 %v306, %v298
    %v379 = vpack.c.b16 %v307, %v299
    %v380 = vpack.c.b16 %v308, %v300
    %v381 = vpack.c.b16 %v309, %v301
    %v382 = vpack.c.b16 %v310, %v302
    %v383 = vpack.c.b16 %v319, %v311
    %v384 = vpack.c.b16 %v320, %v312
    %v385 = vpack.c.b16 %v321, %v313
    %v386 = vpack.c.b16 %v322, %v314
    %v387 = vpack.c.b16 %v323, %v315
    %v388 = vpack.c.b16 %v324, %v316
    %v389 = vpack.c.b16 %v325, %v317
    %v390 = vpack.c.b16 %v326, %v318
    %455 = vmatprep.subr.bf16.mxu0 %v328
    %456 = vmatpush1.bf16.msra.mxu0 %v327
    %457 = vmatprep.subr.bf16.mxu0 %v336
    %458 = vmatpush1.bf16.msra.mxu0 %v335
    %459 = vmatprep.subr.bf16.mxu0 %v344
    %460 = vmatpush1.bf16.msra.mxu0 %v343
    %461 = vmatprep.subr.bf16.mxu0 %v352
    %462 = vmatpush1.bf16.msra.mxu0 %v351
    %463 = vmatprep.subr.bf16.mxu0 %v360
    %464 = vmatpush1.bf16.msra.mxu0 %v359
    %465 = vmatprep.subr.bf16.mxu0 %v368
    %466 = vmatpush1.bf16.msra.mxu0 %v367
    %467 = vmatprep.subr.bf16.mxu0 %v376
    %468 = vmatpush1.bf16.msra.mxu0 %v375
    %469 = vmatprep.subr.bf16.mxu0 %v384
    %470 = vmatpush1.bf16.msra.mxu0 %v383
    %471 = vmatprep.subr.bf16.mxu0 0
    %472 = vmatpush1.bf16.msra.mxu0 0
    %473 = vmatprep.subr.bf16.mxu0 0
    %474 = vmatpush1.bf16.msra.mxu0 0
    %475 = vmatprep.subr.bf16.mxu0 0
    %476 = vmatpush1.bf16.msra.mxu0 0
    %477 = vmatprep.subr.bf16.mxu0 0
    %478 = vmatpush1.bf16.msra.mxu0 0
    %479 = vmatprep.subr.bf16.mxu0 0
    %480 = vmatpush1.bf16.msra.mxu0 0
    %481 = vmatprep.subr.bf16.mxu0 0
    %482 = vmatpush1.bf16.msra.mxu0 0
    %483 = vmatprep.subr.bf16.mxu0 0
    %484 = vmatpush1.bf16.msra.mxu0 0
    %485 = vmatprep.subr.bf16.mxu0 0
    %486 = vmatpush1.bf16.msra.mxu0 0
    %487 = vmatprep.mubr.bf16.mxu0 0
    %488 = vmatmul.mubr.bf16.gmra.mrb[0].mxu0 %v133
    %v489 = vpop.f32.mrb[0].mxu0
    %v490 = vadd.f32 0.0, %v489
    %v491 = vpop.f32.mrb[0].mxu0
    %v492 = vadd.f32 0.0, %v491
    %v493 = vpop.f32.mrb[0].mxu0
    %v494 = vadd.f32 0.0, %v493
    %v495 = vpop.f32.mrb[0].mxu0
    %v496 = vadd.f32 0.0, %v495
    %497 = vdwg.mxu0
    %498 = vmatprep.subr.bf16.mxu0 %v330
    %499 = vmatpush1.bf16.msra.mxu0 %v329
    %500 = vmatprep.subr.bf16.mxu0 %v338
    %501 = vmatpush1.bf16.msra.mxu0 %v337
    %502 = vmatprep.subr.bf16.mxu0 %v346
    %503 = vmatpush1.bf16.msra.mxu0 %v345
    %504 = vmatprep.subr.bf16.mxu0 %v354
    %505 = vmatpush1.bf16.msra.mxu0 %v353
    %506 = vmatprep.subr.bf16.mxu0 %v362
    %507 = vmatpush1.bf16.msra.mxu0 %v361
    %508 = vmatprep.subr.bf16.mxu0 %v370
    %509 = vmatpush1.bf16.msra.mxu0 %v369
    %510 = vmatprep.subr.bf16.mxu0 %v378
    %511 = vmatpush1.bf16.msra.mxu0 %v377
    %512 = vmatprep.subr.bf16.mxu0 %v386
    %513 = vmatpush1.bf16.msra.mxu0 %v385
    %514 = vmatprep.subr.bf16.mxu0 0
    %515 = vmatpush1.bf16.msra.mxu0 0
    %516 = vmatprep.subr.bf16.mxu0 0
    %517 = vmatpush1.bf16.msra.mxu0 0
    %518 = vmatprep.subr.bf16.mxu0 0
    %519 = vmatpush1.bf16.msra.mxu0 0
    %520 = vmatprep.subr.bf16.mxu0 0
    %521 = vmatpush1.bf16.msra.mxu0 0
    %522 = vmatprep.subr.bf16.mxu0 0
    %523 = vmatpush1.bf16.msra.mxu0 0
    %524 = vmatprep.subr.bf16.mxu0 0
    %525 = vmatpush1.bf16.msra.mxu0 0
    %526 = vmatprep.subr.bf16.mxu0 0
    %527 = vmatpush1.bf16.msra.mxu0 0
    %528 = vmatprep.subr.bf16.mxu0 0
    %529 = vmatpush1.bf16.msra.mxu0 0
    %530 = vmatprep.mubr.bf16.mxu0 0
    %531 = vmatmul.mubr.bf16.gmra.mrb[0].mxu0 %v133
    %v532 = vpop.f32.mrb[0].mxu0
    %v533 = vadd.f32 0.0, %v532
    %v534 = vpop.f32.mrb[0].mxu0
    %v535 = vadd.f32 0.0, %v534
    %v536 = vpop.f32.mrb[0].mxu0
    %v537 = vadd.f32 0.0, %v536
    %v538 = vpop.f32.mrb[0].mxu0
    %v539 = vadd.f32 0.0, %v538
    %540 = vdwg.mxu0
    %541 = vmatprep.subr.bf16.mxu0 %v332
    %542 = vmatpush1.bf16.msra.mxu0 %v331
    %543 = vmatprep.subr.bf16.mxu0 %v340
    %544 = vmatpush1.bf16.msra.mxu0 %v339
    %545 = vmatprep.subr.bf16.mxu0 %v348
    %546 = vmatpush1.bf16.msra.mxu0 %v347
    %547 = vmatprep.subr.bf16.mxu0 %v356
    %548 = vmatpush1.bf16.msra.mxu0 %v355
    %549 = vmatprep.subr.bf16.mxu0 %v364
    %550 = vmatpush1.bf16.msra.mxu0 %v363
    %551 = vmatprep.subr.bf16.mxu0 %v372
    %552 = vmatpush1.bf16.msra.mxu0 %v371
    %553 = vmatprep.subr.bf16.mxu0 %v380
    %554 = vmatpush1.bf16.msra.mxu0 %v379
    %555 = vmatprep.subr.bf16.mxu0 %v388
    %556 = vmatpush1.bf16.msra.mxu0 %v387
    %557 = vmatprep.subr.bf16.mxu0 0
    %558 = vmatpush1.bf16.msra.mxu0 0
    %559 = vmatprep.subr.bf16.mxu0 0
    %560 = vmatpush1.bf16.msra.mxu0 0
    %561 = vmatprep.subr.bf16.mxu0 0
    %562 = vmatpush1.bf16.msra.mxu0 0
    %563 = vmatprep.subr.bf16.mxu0 0
    %564 = vmatpush1.bf16.msra.mxu0 0
    %565 = vmatprep.subr.bf16.mxu0 0
    %566 = vmatpush1.bf16.msra.mxu0 0
    %567 = vmatprep.subr.bf16.mxu0 0
    %568 = vmatpush1.bf16.msra.mxu0 0
    %569 = vmatprep.subr.bf16.mxu0 0
    %570 = vmatpush1.bf16.msra.mxu0 0
    %571 = vmatprep.subr.bf16.mxu0 0
    %572 = vmatpush1.bf16.msra.mxu0 0
    %573 = vmatprep.mubr.bf16.mxu0 0
    %574 = vmatmul.mubr.bf16.gmra.mrb[0].mxu0 %v133
    %v575 = vpop.f32.mrb[0].mxu0
    %v576 = vadd.f32 0.0, %v575
    %v577 = vpop.f32.mrb[0].mxu0
    %v578 = vadd.f32 0.0, %v577
    %v579 = vpop.f32.mrb[0].mxu0
    %v580 = vadd.f32 0.0, %v579
    %v581 = vpop.f32.mrb[0].mxu0
    %v582 = vadd.f32 0.0, %v581
    %583 = vdwg.mxu0
    %584 = vmatprep.subr.bf16.mxu0 %v334
    %585 = vmatpush1.bf16.msra.mxu0 %v333
    %586 = vmatprep.subr.bf16.mxu0 %v342
    %587 = vmatpush1.bf16.msra.mxu0 %v341
    %588 = vmatprep.subr.bf16.mxu0 %v350
    %589 = vmatpush1.bf16.msra.mxu0 %v349
    %590 = vmatprep.subr.bf16.mxu0 %v358
    %591 = vmatpush1.bf16.msra.mxu0 %v357
    %592 = vmatprep.subr.bf16.mxu0 %v366
    %593 = vmatpush1.bf16.msra.mxu0 %v365
    %594 = vmatprep.subr.bf16.mxu0 %v374
    %595 = vmatpush1.bf16.msra.mxu0 %v373
    %596 = vmatprep.subr.bf16.mxu0 %v382
    %597 = vmatpush1.bf16.msra.mxu0 %v381
    %598 = vmatprep.subr.bf16.mxu0 %v390
    %599 = vmatpush1.bf16.msra.mxu0 %v389
    %600 = vmatprep.subr.bf16.mxu0 0
    %601 = vmatpush1.bf16.msra.mxu0 0
    %602 = vmatprep.subr.bf16.mxu0 0
    %603 = vmatpush1.bf16.msra.mxu0 0
    %604 = vmatprep.subr.bf16.mxu0 0
    %605 = vmatpush1.bf16.msra.mxu0 0
    %606 = vmatprep.subr.bf16.mxu0 0
    %607 = vmatpush1.bf16.msra.mxu0 0
    %608 = vmatprep.subr.bf16.mxu0 0
    %609 = vmatpush1.bf16.msra.mxu0 0
    %610 = vmatprep.subr.bf16.mxu0 0
    %611 = vmatpush1.bf16.msra.mxu0 0
    %612 = vmatprep.subr.bf16.mxu0 0
    %613 = vmatpush1.bf16.msra.mxu0 0
    %614 = vmatprep.subr.bf16.mxu0 0
    %615 = vmatpush1.bf16.msra.mxu0 0
    %616 = vmatprep.mubr.bf16.mxu0 0
    %617 = vmatmul.mubr.bf16.gmra.mrb[0].mxu0 %v133
    %v618 = vpop.f32.mrb[0].mxu0
    %v619 = vadd.f32 0.0, %v618
    %v620 = vpop.f32.mrb[0].mxu0
    %v621 = vadd.f32 0.0, %v620
    %v622 = vpop.f32.mrb[0].mxu0
    %v623 = vadd.f32 0.0, %v622
    %v624 = vpop.f32.mrb[0].mxu0
    %v625 = vadd.f32 0.0, %v624
    %626 = vdwg.mxu0
    %v627 = vxor.u32 %v490, 2147483648
    %v628 = vxor.u32 %v492, 2147483648
    %v629 = vxor.u32 %v533, 2147483648
    %v630 = vxor.u32 %v535, 2147483648
    %v631 = vxor.u32 %v494, 2147483648
    %v632 = vxor.u32 %v496, 2147483648
    %v633 = vxor.u32 %v537, 2147483648
    %v634 = vxor.u32 %v539, 2147483648
    %v635 = vmul.f32 %v627, 1.442695
    %v636 = vpow.pop %v635
    %v637 = vmul.f32 %v628, 1.442695
    %v638 = vpow.pop %v637
    %v639 = vmul.f32 %v629, 1.442695
    %v640 = vpow.pop %v639
    %v641 = vmul.f32 %v630, 1.442695
    %v642 = vpow.pop %v641
    %v643 = vmul.f32 %v631, 1.442695
    %v644 = vpow.pop %v643
    %v645 = vmul.f32 %v632, 1.442695
    %v646 = vpow.pop %v645
    %v647 = vmul.f32 %v633, 1.442695
    %v648 = vpow.pop %v647
    %v649 = vmul.f32 %v634, 1.442695
    %v650 = vpow.pop %v649
    %v651 = vadd.f32 %v636, 1.0
    %v652 = vadd.f32 %v638, 1.0
    %v653 = vadd.f32 %v640, 1.0
    %v654 = vadd.f32 %v642, 1.0
    %v655 = vadd.f32 %v644, 1.0
    %v656 = vadd.f32 %v646, 1.0
    %v657 = vadd.f32 %v648, 1.0
    %v658 = vadd.f32 %v650, 1.0
    %v659 = vrcp.pop %v651
    %v660 = vmul.f32 1.0, %v659
    %v661 = vrcp.pop %v652
    %v662 = vmul.f32 1.0, %v661
    %v663 = vrcp.pop %v653
    %v664 = vmul.f32 1.0, %v663
    %v665 = vrcp.pop %v654
    %v666 = vmul.f32 1.0, %v665
    %v667 = vrcp.pop %v655
    %v668 = vmul.f32 1.0, %v667
    %v669 = vrcp.pop %v656
    %v670 = vmul.f32 1.0, %v669
    %v671 = vrcp.pop %v657
    %v672 = vmul.f32 1.0, %v671
    %v673 = vrcp.pop %v658
    %v674 = vmul.f32 1.0, %v673
    %v675 = vmul.f32 %v490, %v660
    %v676 = vmul.f32 %v492, %v662
    %v677 = vmul.f32 %v533, %v664
    %v678 = vmul.f32 %v535, %v666
    %v679 = vmul.f32 %v494, %v668
    %v680 = vmul.f32 %v496, %v670
    %v681 = vmul.f32 %v537, %v672
    %v682 = vmul.f32 %v539, %v674
    %v683 = vmul.f32 %v675, %v576
    %v684 = vmul.f32 %v676, %v578
    %v685 = vmul.f32 %v677, %v619
    %v686 = vmul.f32 %v678, %v621
    %v687 = vmul.f32 %v679, %v580
    %v688 = vmul.f32 %v680, %v582
    %v689 = vmul.f32 %v681, %v623
    %v690 = vmul.f32 %v682, %v625
    %v691 = vld [vmem:[#allocation2] sm:$0xff]
    %v692 = vld [vmem:[#allocation2 + $0x8] sm:$0xff]
    %v693 = vpack.c.bf16 %v687, %v683
    %v694 = vpack.c.bf16 %v688, %v684
    %v695 = vpack.c.bf16 %v689, %v685
    %v696 = vpack.c.bf16 %v690, %v686
    %v697 = vld [vmem:[#allocation8] sm:$0xf]
    %v698 = vld [vmem:[#allocation8 + $0x4] sm:$0xf]
    %v699 = vld [vmem:[#allocation8 + $0x8] sm:$0xf]
    %v700 = vld [vmem:[#allocation8 + $0xc] sm:$0xf]
    %v701 = vld [vmem:[#allocation8 + $0x10] sm:$0xf]
    %v702 = vld [vmem:[#allocation8 + $0x14] sm:$0xf]
    %v703 = vld [vmem:[#allocation8 + $0x18] sm:$0xf]
    %v704 = vld [vmem:[#allocation8 + $0x1c] sm:$0xf]
    %v705 = vld [vmem:[#allocation8 + $0x20] sm:$0xf]
    %v706 = vld [vmem:[#allocation8 + $0x24] sm:$0xf]
    %v707 = vld [vmem:[#allocation8 + $0x28] sm:$0xf]
    %v708 = vld [vmem:[#allocation8 + $0x2c] sm:$0xf]
    %v709 = vld [vmem:[#allocation8 + $0x30] sm:$0xf]
    %v710 = vld [vmem:[#allocation8 + $0x34] sm:$0xf]
    %v711 = vld [vmem:[#allocation8 + $0x38] sm:$0xf]
    %v712 = vld [vmem:[#allocation8 + $0x3c] sm:$0xf]
    %v713 = vld [vmem:[#allocation8 + $0x40] sm:$0xf]
    %v714 = vld [vmem:[#allocation8 + $0x44] sm:$0xf]
    %v715 = vld [vmem:[#allocation8 + $0x48] sm:$0xf]
    %v716 = vld [vmem:[#allocation8 + $0x4c] sm:$0xf]
    %v717 = vld [vmem:[#allocation8 + $0x50] sm:$0xf]
    %v718 = vld [vmem:[#allocation8 + $0x54] sm:$0xf]
    %v719 = vld [vmem:[#allocation8 + $0x58] sm:$0xf]
    %v720 = vld [vmem:[#allocation8 + $0x5c] sm:$0xf]
    %v721 = vld [vmem:[#allocation8 + $0x60] sm:$0xf]
    %v722 = vld [vmem:[#allocation8 + $0x64] sm:$0xf]
    %v723 = vld [vmem:[#allocation8 + $0x68] sm:$0xf]
    %v724 = vld [vmem:[#allocation8 + $0x6c] sm:$0xf]
    %v725 = vld [vmem:[#allocation8 + $0x70] sm:$0xf]
    %v726 = vld [vmem:[#allocation8 + $0x74] sm:$0xf]
    %v727 = vld [vmem:[#allocation8 + $0x78] sm:$0xf]
    %v728 = vld [vmem:[#allocation8 + $0x7c] sm:$0xf]
    %v729 = vld [vmem:[#allocation8 + $0x80] sm:$0xf]
    %v730 = vld [vmem:[#allocation8 + $0x84] sm:$0xf]
    %v731 = vld [vmem:[#allocation8 + $0x88] sm:$0xf]
    %v732 = vld [vmem:[#allocation8 + $0x8c] sm:$0xf]
    %v733 = vld [vmem:[#allocation8 + $0x90] sm:$0xf]
    %v734 = vld [vmem:[#allocation8 + $0x94] sm:$0xf]
    %v735 = vld [vmem:[#allocation8 + $0x98] sm:$0xf]
    %v736 = vld [vmem:[#allocation8 + $0x9c] sm:$0xf]
    %v737 = vld [vmem:[#allocation8 + $0xa0] sm:$0xf]
    %v738 = vld [vmem:[#allocation8 + $0xa4] sm:$0xf]
    %v739 = vld [vmem:[#allocation8 + $0xa8] sm:$0xf]
    %v740 = vld [vmem:[#allocation8 + $0xac] sm:$0xf]
    %v741 = vld [vmem:[#allocation8 + $0xb0] sm:$0xf]
    %v742 = vld [vmem:[#allocation8 + $0xb4] sm:$0xf]
    %v743 = vld [vmem:[#allocation8 + $0xb8] sm:$0xf]
    %v744 = vld [vmem:[#allocation8 + $0xbc] sm:$0xf]
    %v745 = vld [vmem:[#allocation8 + $0xc0] sm:$0xf]
    %v746 = vld [vmem:[#allocation8 + $0xc4] sm:$0xf]
    %v747 = vld [vmem:[#allocation8 + $0xc8] sm:$0xf]
    %v748 = vld [vmem:[#allocation8 + $0xcc] sm:$0xf]
    %v749 = vld [vmem:[#allocation8 + $0xd0] sm:$0xf]
    %v750 = vld [vmem:[#allocation8 + $0xd4] sm:$0xf]
    %v751 = vld [vmem:[#allocation8 + $0xd8] sm:$0xf]
    %v752 = vld [vmem:[#allocation8 + $0xdc] sm:$0xf]
    %v753 = vld [vmem:[#allocation8 + $0xe0] sm:$0xf]
    %v754 = vld [vmem:[#allocation8 + $0xe4] sm:$0xf]
    %v755 = vld [vmem:[#allocation8 + $0xe8] sm:$0xf]
    %v756 = vld [vmem:[#allocation8 + $0xec] sm:$0xf]
    %v757 = vld [vmem:[#allocation8 + $0xf0] sm:$0xf]
    %v758 = vld [vmem:[#allocation8 + $0xf4] sm:$0xf]
    %v759 = vld [vmem:[#allocation8 + $0xf8] sm:$0xf]
    %v760 = vld [vmem:[#allocation8 + $0xfc] sm:$0xf]
    %v825 = vunpack.c.l.b16 %v697
    %v826 = vunpack.c.l.b16 %v698
    %v827 = vunpack.c.l.b16 %v699
    %v828 = vunpack.c.l.b16 %v700
    %v829 = vunpack.c.l.b16 %v701
    %v830 = vunpack.c.l.b16 %v702
    %v831 = vunpack.c.l.b16 %v703
    %v832 = vunpack.c.l.b16 %v704
    %v833 = vunpack.c.l.b16 %v705
    %v834 = vunpack.c.l.b16 %v706
    %v835 = vunpack.c.l.b16 %v707
    %v836 = vunpack.c.l.b16 %v708
    %v837 = vunpack.c.l.b16 %v709
    %v838 = vunpack.c.l.b16 %v710
    %v839 = vunpack.c.l.b16 %v711
    %v840 = vunpack.c.l.b16 %v712
    %v841 = vunpack.c.l.b16 %v713
    %v842 = vunpack.c.l.b16 %v714
    %v843 = vunpack.c.l.b16 %v715
    %v844 = vunpack.c.l.b16 %v716
    %v845 = vunpack.c.l.b16 %v717
    %v846 = vunpack.c.l.b16 %v718
    %v847 = vunpack.c.l.b16 %v719
    %v848 = vunpack.c.l.b16 %v720
    %v849 = vunpack.c.l.b16 %v721
    %v850 = vunpack.c.l.b16 %v722
    %v851 = vunpack.c.l.b16 %v723
    %v852 = vunpack.c.l.b16 %v724
    %v853 = vunpack.c.l.b16 %v725
    %v854 = vunpack.c.l.b16 %v726
    %v855 = vunpack.c.l.b16 %v727
    %v856 = vunpack.c.l.b16 %v728
    %v857 = vunpack.c.l.b16 %v729
    %v858 = vunpack.c.l.b16 %v730
    %v859 = vunpack.c.l.b16 %v731
    %v860 = vunpack.c.l.b16 %v732
    %v861 = vunpack.c.l.b16 %v733
    %v862 = vunpack.c.l.b16 %v734
    %v863 = vunpack.c.l.b16 %v735
    %v864 = vunpack.c.l.b16 %v736
    %v865 = vunpack.c.l.b16 %v737
    %v866 = vunpack.c.l.b16 %v738
    %v867 = vunpack.c.l.b16 %v739
    %v868 = vunpack.c.l.b16 %v740
    %v869 = vunpack.c.l.b16 %v741
    %v870 = vunpack.c.l.b16 %v742
    %v871 = vunpack.c.l.b16 %v743
    %v872 = vunpack.c.l.b16 %v744
    %v873 = vunpack.c.l.b16 %v745
    %v874 = vunpack.c.l.b16 %v746
    %v875 = vunpack.c.l.b16 %v747
    %v876 = vunpack.c.l.b16 %v748
    %v877 = vunpack.c.l.b16 %v749
    %v878 = vunpack.c.l.b16 %v750
    %v879 = vunpack.c.l.b16 %v751
    %v880 = vunpack.c.l.b16 %v752
    %v881 = vunpack.c.l.b16 %v753
    %v882 = vunpack.c.l.b16 %v754
    %v883 = vunpack.c.l.b16 %v755
    %v884 = vunpack.c.l.b16 %v756
    %v885 = vunpack.c.l.b16 %v757
    %v886 = vunpack.c.l.b16 %v758
    %v887 = vunpack.c.l.b16 %v759
    %v888 = vunpack.c.l.b16 %v760
    %v889 = vpack.c.b16 %v826, %v825
    %v890 = vpack.c.b16 %v828, %v827
    %v891 = vpack.c.b16 %v830, %v829
    %v892 = vpack.c.b16 %v832, %v831
    %v893 = vpack.c.b16 %v834, %v833
    %v894 = vpack.c.b16 %v836, %v835
    %v895 = vpack.c.b16 %v838, %v837
    %v896 = vpack.c.b16 %v840, %v839
    %v897 = vpack.c.b16 %v842, %v841
    %v898 = vpack.c.b16 %v844, %v843
    %v899 = vpack.c.b16 %v846, %v845
    %v900 = vpack.c.b16 %v848, %v847
    %v901 = vpack.c.b16 %v850, %v849
    %v902 = vpack.c.b16 %v852, %v851
    %v903 = vpack.c.b16 %v854, %v853
    %v904 = vpack.c.b16 %v856, %v855
    %v905 = vpack.c.b16 %v858, %v857
    %v906 = vpack.c.b16 %v860, %v859
    %v907 = vpack.c.b16 %v862, %v861
    %v908 = vpack.c.b16 %v864, %v863
    %v909 = vpack.c.b16 %v866, %v865
    %v910 = vpack.c.b16 %v868, %v867
    %v911 = vpack.c.b16 %v870, %v869
    %v912 = vpack.c.b16 %v872, %v871
    %v913 = vpack.c.b16 %v874, %v873
    %v914 = vpack.c.b16 %v876, %v875
    %v915 = vpack.c.b16 %v878, %v877
    %v916 = vpack.c.b16 %v880, %v879
    %v917 = vpack.c.b16 %v882, %v881
    %v918 = vpack.c.b16 %v884, %v883
    %v919 = vpack.c.b16 %v886, %v885
    %v920 = vpack.c.b16 %v888, %v887
    %953 = vmatprep.subr.bf16.mxu0 0
    %954 = vmatpush1.bf16.msra.mxu0 %v889
    %955 = vmatprep.subr.bf16.mxu0 0
    %956 = vmatpush1.bf16.msra.mxu0 %v890
    %957 = vmatprep.subr.bf16.mxu0 0
    %958 = vmatpush1.bf16.msra.mxu0 %v891
    %959 = vmatprep.subr.bf16.mxu0 0
    %960 = vmatpush1.bf16.msra.mxu0 %v892
    %961 = vmatprep.subr.bf16.mxu0 0
    %962 = vmatpush1.bf16.msra.mxu0 %v893
    %963 = vmatprep.subr.bf16.mxu0 0
    %964 = vmatpush1.bf16.msra.mxu0 %v894
    %965 = vmatprep.subr.bf16.mxu0 0
    %966 = vmatpush1.bf16.msra.mxu0 %v895
    %967 = vmatprep.subr.bf16.mxu0 0
    %968 = vmatpush1.bf16.msra.mxu0 %v896
    %969 = vmatprep.subr.bf16.mxu0 0
    %970 = vmatpush1.bf16.msra.mxu0 %v897
    %971 = vmatprep.subr.bf16.mxu0 0
    %972 = vmatpush1.bf16.msra.mxu0 %v898
    %973 = vmatprep.subr.bf16.mxu0 0
    %974 = vmatpush1.bf16.msra.mxu0 %v899
    %975 = vmatprep.subr.bf16.mxu0 0
    %976 = vmatpush1.bf16.msra.mxu0 %v900
    %977 = vmatprep.subr.bf16.mxu0 0
    %978 = vmatpush1.bf16.msra.mxu0 %v901
    %979 = vmatprep.subr.bf16.mxu0 0
    %980 = vmatpush1.bf16.msra.mxu0 %v902
    %981 = vmatprep.subr.bf16.mxu0 0
    %982 = vmatpush1.bf16.msra.mxu0 %v903
    %983 = vmatprep.subr.bf16.mxu0 0
    %984 = vmatpush1.bf16.msra.mxu0 %v904
    %985 = vmatprep.mubr.bf16.mxu0 %v694
    %986 = vmatmul.mubr.bf16.gmra.mrb[0].mxu0 %v693
    %v987 = vpop.f32.mrb[0].mxu0
    %v988 = vadd.f32 0.0, %v987
    %v989 = vpop.f32.mrb[0].mxu0
    %v990 = vpop.f32.mrb[0].mxu0
    %v991 = vadd.f32 0.0, %v990
    %v992 = vpop.f32.mrb[0].mxu0
    %993 = vdwg.mxu0
    %994 = vmatprep.subr.bf16.mxu0 0
    %995 = vmatpush1.bf16.msra.mxu0 %v905
    %996 = vmatprep.subr.bf16.mxu0 0
    %997 = vmatpush1.bf16.msra.mxu0 %v906
    %998 = vmatprep.subr.bf16.mxu0 0
    %999 = vmatpush1.bf16.msra.mxu0 %v907
    %1000 = vmatprep.subr.bf16.mxu0 0
    %1001 = vmatpush1.bf16.msra.mxu0 %v908
    %1002 = vmatprep.subr.bf16.mxu0 0
    %1003 = vmatpush1.bf16.msra.mxu0 %v909
    %1004 = vmatprep.subr.bf16.mxu0 0
    %1005 = vmatpush1.bf16.msra.mxu0 %v910
    %1006 = vmatprep.subr.bf16.mxu0 0
    %1007 = vmatpush1.bf16.msra.mxu0 %v911
    %1008 = vmatprep.subr.bf16.mxu0 0
    %1009 = vmatpush1.bf16.msra.mxu0 %v912
    %1010 = vmatprep.subr.bf16.mxu0 0
    %1011 = vmatpush1.bf16.msra.mxu0 %v913
    %1012 = vmatprep.subr.bf16.mxu0 0
    %1013 = vmatpush1.bf16.msra.mxu0 %v914
    %1014 = vmatprep.subr.bf16.mxu0 0
    %1015 = vmatpush1.bf16.msra.mxu0 %v915
    %1016 = vmatprep.subr.bf16.mxu0 0
    %1017 = vmatpush1.bf16.msra.mxu0 %v916
    %1018 = vmatprep.subr.bf16.mxu0 0
    %1019 = vmatpush1.bf16.msra.mxu0 %v917
    %1020 = vmatprep.subr.bf16.mxu0 0
    %1021 = vmatpush1.bf16.msra.mxu0 %v918
    %1022 = vmatprep.subr.bf16.mxu0 0
    %1023 = vmatpush1.bf16.msra.mxu0 %v919
    %1024 = vmatprep.subr.bf16.mxu0 0
    %1025 = vmatpush1.bf16.msra.mxu0 %v920
    %1026 = vmatprep.mubr.bf16.mxu0 %v696
    %1027 = vmatmul.mubr.bf16.gmra.mrb[0].mxu0 %v695
    %v1028 = vpop.f32.mrb[0].mxu0
    %v1029 = vadd.f32 %v988, %v1028
    %v1030 = vpop.f32.mrb[0].mxu0
    %v1031 = vpop.f32.mrb[0].mxu0
    %v1032 = vadd.f32 %v991, %v1031
    %v1033 = vpop.f32.mrb[0].mxu0
    %1034 = vdwg.mxu0
    %v1035 = vadd.f32 %v691, %v1029
    %v1036 = vadd.f32 %v692, %v1032
    %1037 = vst [vmem:[#allocation2] sm:$0xff] %v1035
    %1038 = vst [vmem:[#allocation2 + $0x8] sm:$0xff] %v1036
    // Predicated region
    $region30: #{tpu_custom_call.1} parent=1 // pred_check
      %p1039 = pneg %p57
    $region31: #{tpu_custom_call.1} parent=1 // pred_check_branch
      %1041 = sbr.rel (%p1039) target = $region33
    $region32: #{tpu_custom_call.1} parent=1 // pred_region
      %v1042 = vld [vmem:[#allocation2] sm:$0xff]
      %v1043 = vld [vmem:[#allocation2 + $0x8] sm:$0xff]
      %1044 = vst [vmem:[#allocation9] sm:$0xff] %v1042
      %1045 = vst [vmem:[#allocation9 + $0x8] sm:$0xff] %v1043
    $region33: #{tpu_custom_call.1} parent=1 // pred_fallthru
      _
    // Predicated region
    $region34: #{tpu_custom_call.1} parent=1 // pred_check
      _
    $region35: #{tpu_custom_call.1} parent=1 // pred_check_branch
      %1047 = sbr.rel (0) target = $region37
    $region36: #{tpu_custom_call.1} parent=1 // pred_region
      %s1049 = ssub.s32 256, 256
      %1050 = vsyncadd [#allocation5], %s1049
      %s1051 = sshll.u32 [#allocation9], 4
      %s1052 = int_to_ptr.vmem [resolvable:$true] %s1051
      %1057 = dma.vmem_to_hbm [thread:$0]  %s1052, 256, %s3, [#allocation5], 128, 128, 8
    $region37: #{tpu_custom_call.1} parent=1 // pred_fallthru
      _
    // Predicated region
    $region38: #{tpu_custom_call.1} parent=1 // pred_check
      _
    $region39: #{tpu_custom_call.1} parent=1 // pred_check_branch
      %1059 = sbr.rel (0) target = $region41
    $region40: #{tpu_custom_call.1} parent=1 // pred_region
      %1060 = dma.done [#allocation5], 256
    $region41: #{tpu_custom_call.1} parent=1 // pred_fallthru
      _
    %1061 = vsyncpa [#allocation4], 1
    %1062 = vsyncpa [#allocation7], 1
    %1063 = vsyncpa [#allocation5], 1

</llo_original>
